<compile_context>
chip_gen: v7x
topology: tpu7x:2x2x1
jax: 0.10.0
libtpu: 0.0.40
codegen_flags: <defaults>
</compile_context>

<pallas_src>
import jax
import jax.numpy as jnp
from jax.experimental import pallas as pl
from jax.experimental.pallas import tpu as pltpu


def _bc_kernel(x_ref, w1_ref, w2_ref, w3_ref, w4_ref, bias_ref, b4_ref, o_ref):
    # Hidden compute dtype comes from the (possibly bf16) hidden-layer weights.
    cdt = w2_ref.dtype

    # Layer 1 in f32 (K = dim_obs is tiny) — no quantization of raw inputs.
    x = x_ref[...]                                                    # (TB, D)
    h = jnp.dot(x, w1_ref[...], preferred_element_type=jnp.float32)
    h = jnp.maximum(h + bias_ref[0:1, :], 0.0).astype(cdt)

    # Layers 2-3: bf16 MXU operands, f32 accumulation.
    h = jnp.dot(h, w2_ref[...], preferred_element_type=jnp.float32)
    h = jnp.maximum(h + bias_ref[1:2, :], 0.0).astype(cdt)

    h = jnp.dot(h, w3_ref[...], preferred_element_type=jnp.float32)
    h = jnp.maximum(h + bias_ref[2:3, :], 0.0).astype(cdt)

    # Final layer, natural orientation: w4 (H,1) is the stationary operand
    # (one MXU weight load per tile), TB/8 LHS pushes.
    y = jnp.dot(h, w4_ref[...], preferred_element_type=jnp.float32)   # (TB, 1)
    # Relayout to (1, TB) on the XLU so the output store stays lane-dense.
    y = jnp.transpose(y)                                              # (1, TB)
    y = y + b4_ref[0, 0]                                              # SMEM scalar splat
    # BC.forward: torch.clamp(actions, min=0)
    o_ref[...] = jnp.maximum(y, 0.0).astype(o_ref.dtype)


def _round_up(x, m):
    return -(-x // m) * m


def _pick_batch_tile(batch, *, max_tile=4096, target_tiles=4):
    """Large tiles to amortize per-step overhead, but keep >=target_tiles tiles
    when the batch allows it so v7x's two TensorCores stay balanced."""
    b128 = _round_up(max(batch, 1), 128)
    tile = _round_up(-(-b128 // target_tiles), 128)
    return max(128, min(max_tile, tile, b128))


def bc_forward(states, params, *, batch_tile=None, use_bf16=True,
               states_buffer_count=2):
    """states: (B, dim_obs) f32 -> (B, 1) f32, clamped at 0."""
    w1, b1, w2, b2, w3, b3, w4, b4 = params
    B, D = states.shape
    H = w1.shape[1]

    if batch_tile is None:
        batch_tile = _pick_batch_tile(B)
    assert batch_tile % 128 == 0, "batch_tile must be a multiple of 128"

    # Pad ragged batches up to a multiple of the batch tile.
    num_tiles = -(-B // batch_tile)
    B_pad = num_tiles * batch_tile
    if B_pad != B:
        states = jnp.pad(states, ((0, B_pad - B), (0, 0)))

    cdt = jnp.bfloat16 if use_bf16 else jnp.float32
    w1c = w1.astype(jnp.float32)            # layer-1 stays f32 (cheap, K=D)
    w2c = w2.astype(cdt)
    w3c = w3.astype(cdt)
    w4c = w4.reshape(H, 1).astype(cdt)      # natural orientation (stationary)

    # Hidden-layer biases packed into one (3, H) f32 VMEM buffer.
    bias_pack = jnp.stack(
        [b1.reshape(H), b2.reshape(H), b3.reshape(H)]).astype(jnp.float32)
    # Final bias as a true SMEM scalar.
    b4s = jnp.reshape(b4, (1, 1)).astype(jnp.float32)

    const_map = lambda i: (0, 0)

    states_spec = pl.BlockSpec((batch_tile, D), lambda i: (i, 0))
    if states_buffer_count > 2:
        # Only if the (strided, 64 B/row) states DMA shows as exposed in xprof.
        states_spec = pl.BlockSpec((batch_tile, D), lambda i: (i, 0),
                                   pipeline_mode=pl.Buffered(states_buffer_count))

    # Advisory cost hint so XLA overlaps neighbours around the custom call.
    flops = 2 * B_pad * (D * H + 2 * H * H + H)
    bytes_accessed = (B_pad * (4 * D + 4)                 # states in, actions out
                      + 4 * D * H + 2 * (2 * H * H + H)   # weights (w1 f32, rest bf16)
                      + (3 * H + 1) * 4)                  # biases
    cost = pl.CostEstimate(flops=flops, transcendentals=0,
                           bytes_accessed=int(bytes_accessed))

    # Only raise scoped VMEM if a caller pushes the tile well past the default
    # cap (v5e default scoped VMEM is 16 MiB).
    compiler_kwargs = dict(dimension_semantics=("parallel",))
    vmem_est = (2 * batch_tile * D * 4          # double-buffered states stream
                + 2 * batch_tile * 4            # double-buffered (1, tile) output
                + 4 * batch_tile * H * 4)       # in-kernel activation temporaries
    if vmem_est > (12 << 20):
        compiler_kwargs["vmem_limit_bytes"] = min(64 << 20, 2 * vmem_est + (16 << 20))

    out = pl.pallas_call(
        _bc_kernel,
        out_shape=jax.ShapeDtypeStruct((1, B_pad), jnp.float32),
        grid_spec=pltpu.PrefetchScalarGridSpec(
            num_scalar_prefetch=0,
            grid=(num_tiles,),
            in_specs=[
                states_spec,                                        # states tile
                pl.BlockSpec((D, H), const_map),                    # w1 (f32)
                pl.BlockSpec((H, H), const_map),                    # w2
                pl.BlockSpec((H, H), const_map),                    # w3
                pl.BlockSpec((H, 1), const_map),                    # w4
                pl.BlockSpec((3, H), const_map),                    # packed biases
                pl.BlockSpec(memory_space=pltpu.MemorySpace.SMEM),  # b4 scalar
            ],
            # Lane-dense output block: (1, batch_tile) columns of (1, B_pad).
            out_specs=pl.BlockSpec((1, batch_tile), lambda i: (0, i)),
        ),
        compiler_params=pltpu.CompilerParams(**compiler_kwargs),
        cost_estimate=cost,
    )(states, w1c, w2c, w3c, w4c, bias_pack, b4s)

    # Layout plumbing back to the PyTorch-shaped (B, 1) result.
    return out.reshape(B_pad, 1)[:B]


def init_params(key, dim_obs, hidden=128):
    """Deterministic init mimicking torch.nn.Linear default (U(-1/sqrt(fan_in), +))."""
    def linear(k, fan_in, fan_out):
        kw, kb = jax.random.split(k)
        bound = 1.0 / jnp.sqrt(fan_in)
        w = jax.random.uniform(kw, (fan_in, fan_out), jnp.float32, -bound, bound)
        b = jax.random.uniform(kb, (1, fan_out), jnp.float32, -bound, bound)
        return w, b

    k1, k2, k3, k4 = jax.random.split(key, 4)
    w1, b1 = linear(k1, dim_obs, hidden)
    w2, b2 = linear(k2, hidden, hidden)
    w3, b3 = linear(k3, hidden, hidden)
    w4, b4 = linear(k4, hidden, 1)
    return (w1, b1, w2, b2, w3, b3, w4, b4)


def bc_forward_ref(states, params, *, match_kernel=False):
    """Pure-JAX reference.  match_kernel=True mirrors the kernel's casts
    (layer-1 in f32, hidden layers with bf16 operands, f32 accumulation)."""
    w1, b1, w2, b2, w3, b3, w4, b4 = params
    cast = (lambda a: a.astype(jnp.bfloat16)) if match_kernel else (lambda a: a)

    h = jnp.maximum(jnp.dot(states, w1, preferred_element_type=jnp.float32) + b1, 0.0)
    h = jnp.maximum(jnp.dot(cast(h), cast(w2), preferred_element_type=jnp.float32) + b2, 0.0)
    h = jnp.maximum(jnp.dot(cast(h), cast(w3), preferred_element_type=jnp.float32) + b3, 0.0)
    y = jnp.dot(cast(h), cast(w4), preferred_element_type=jnp.float32) + b4
    return jnp.maximum(y, 0.0)


if __name__ == "__main__":
    dim_obs = 16
    hidden = 128          # fixed by the Actor module
    batch = 300           # deliberately ragged: wrapper pads to the tile size

    key = jax.random.PRNGKey(0)
    k_params, k_states = jax.random.split(key)
    params = init_params(k_params, dim_obs, hidden)
    states = jax.random.normal(k_states, (batch, dim_obs), jnp.float32)

    out = jax.block_until_ready(bc_forward(states, params))
    assert out.shape == (batch, 1)

    # Exact-semantics check (reference with matching mixed-precision casts).
    ref_match = bc_forward_ref(states, params, match_kernel=True)
    assert jnp.allclose(out, ref_match, atol=2e-3, rtol=2e-3), "mismatch vs matched reference"

    # Sanity check vs full-f32 reference (bf16 hidden layers, f32 accumulation).
    ref_f32 = bc_forward_ref(states, params, match_kernel=False)
    assert jnp.allclose(out, ref_f32, atol=5e-2, rtol=5e-2), "mismatch vs f32 reference"

    assert bool(jnp.all(out >= 0.0)), "clamp(min=0) violated"

    print("KERNEL_OK")
</pallas_src>

<mosaic_0001>
module attributes {stable_mosaic.version = 11 : i64} {
  func.func @_bc_kernel(%arg0: i32, %arg1: memref<128x16xf32, #tpu.memory_space<vmem>>, %arg2: memref<16x128xf32, #tpu.memory_space<vmem>>, %arg3: memref<128x128xbf16, #tpu.memory_space<vmem>>, %arg4: memref<128x128xbf16, #tpu.memory_space<vmem>>, %arg5: memref<128x1xbf16, #tpu.memory_space<vmem>>, %arg6: memref<3x128xf32, #tpu.memory_space<vmem>>, %arg7: memref<1x1xf32, #tpu.memory_space<smem>>, %arg8: memref<1x128xf32, #tpu.memory_space<vmem>>) attributes {dimension_semantics = [#tpu.dimension_semantics<parallel>], iteration_bounds = array<i64: 3>, scalar_prefetch = 0 : i64, scratch_operands = 0 : i64, tpu.core_type = #tpu.core_type<tc>, window_params = [{transform_indices = @transform_0, window_bounds = array<i64: 128, 16>}, {pipeline_mode = #tpu.pipeline_mode<synchronous>, transform_indices = @transform_1, window_bounds = array<i64: 16, 128>}, {pipeline_mode = #tpu.pipeline_mode<synchronous>, transform_indices = @transform_2, window_bounds = array<i64: 128, 128>}, {pipeline_mode = #tpu.pipeline_mode<synchronous>, transform_indices = @transform_3, window_bounds = array<i64: 128, 128>}, {pipeline_mode = #tpu.pipeline_mode<synchronous>, transform_indices = @transform_4, window_bounds = array<i64: 128, 1>}, {pipeline_mode = #tpu.pipeline_mode<synchronous>, transform_indices = @transform_5, window_bounds = array<i64: 3, 128>}, {transform_indices = @transform_6, window_bounds = array<i64: 1, 1>}, {transform_indices = @transform_7, window_bounds = array<i64: 1, 128>}]} {
    %c0 = arith.constant 0 : index
    %c0_0 = arith.constant 0 : index
    %0 = vector.load %arg1[%c0, %c0_0] : memref<128x16xf32, #tpu.memory_space<vmem>>, vector<128x16xf32>
    %c0_1 = arith.constant 0 : index
    %c0_2 = arith.constant 0 : index
    %1 = vector.load %arg2[%c0_1, %c0_2] : memref<16x128xf32, #tpu.memory_space<vmem>>, vector<16x128xf32>
    %cst = arith.constant dense<0.000000e+00> : vector<128x128xf32>
    %2 = tpu.matmul %0, %1, %cst {dimension_numbers = #tpu.dot_dimension_numbers<[1], [0], [0], [1], [0, 0, 1, 1], [], []>} : vector<128x16xf32>, vector<16x128xf32>, vector<128x128xf32> -> vector<128x128xf32>
    %c0_3 = arith.constant 0 : index
    %c0_4 = arith.constant 0 : index
    %3 = vector.load %arg6[%c0_3, %c0_4] : memref<3x128xf32, #tpu.memory_space<vmem>>, vector<1x128xf32>
    %4 = vector.broadcast %3 : vector<1x128xf32> to vector<128x128xf32>
    %5 = arith.addf %2, %4 : vector<128x128xf32>
    %cst_5 = arith.constant 0.000000e+00 : f32
    %6 = vector.broadcast %cst_5 : f32 to vector<128x128xf32>
    %7 = arith.maximumf %5, %6 : vector<128x128xf32>
    %8 = arith.truncf %7 : vector<128x128xf32> to vector<128x128xbf16>
    %c0_6 = arith.constant 0 : index
    %c0_7 = arith.constant 0 : index
    %9 = vector.load %arg3[%c0_6, %c0_7] : memref<128x128xbf16, #tpu.memory_space<vmem>>, vector<128x128xbf16>
    %cst_8 = arith.constant dense<0.000000e+00> : vector<128x128xf32>
    %10 = tpu.matmul %8, %9, %cst_8 {dimension_numbers = #tpu.dot_dimension_numbers<[1], [0], [0], [1], [0, 0, 1, 1], [], []>} : vector<128x128xbf16>, vector<128x128xbf16>, vector<128x128xf32> -> vector<128x128xf32>
    %c1 = arith.constant 1 : index
    %c0_9 = arith.constant 0 : index
    %11 = vector.load %arg6[%c1, %c0_9] : memref<3x128xf32, #tpu.memory_space<vmem>>, vector<1x128xf32>
    %12 = vector.broadcast %11 : vector<1x128xf32> to vector<128x128xf32>
    %13 = arith.addf %10, %12 : vector<128x128xf32>
    %cst_10 = arith.constant 0.000000e+00 : f32
    %14 = vector.broadcast %cst_10 : f32 to vector<128x128xf32>
    %15 = arith.maximumf %13, %14 : vector<128x128xf32>
    %16 = arith.truncf %15 : vector<128x128xf32> to vector<128x128xbf16>
    %c0_11 = arith.constant 0 : index
    %c0_12 = arith.constant 0 : index
    %17 = vector.load %arg4[%c0_11, %c0_12] : memref<128x128xbf16, #tpu.memory_space<vmem>>, vector<128x128xbf16>
    %cst_13 = arith.constant dense<0.000000e+00> : vector<128x128xf32>
    %18 = tpu.matmul %16, %17, %cst_13 {dimension_numbers = #tpu.dot_dimension_numbers<[1], [0], [0], [1], [0, 0, 1, 1], [], []>} : vector<128x128xbf16>, vector<128x128xbf16>, vector<128x128xf32> -> vector<128x128xf32>
    %c2 = arith.constant 2 : index
    %c0_14 = arith.constant 0 : index
    %19 = vector.load %arg6[%c2, %c0_14] : memref<3x128xf32, #tpu.memory_space<vmem>>, vector<1x128xf32>
    %20 = vector.broadcast %19 : vector<1x128xf32> to vector<128x128xf32>
    %21 = arith.addf %18, %20 : vector<128x128xf32>
    %cst_15 = arith.constant 0.000000e+00 : f32
    %22 = vector.broadcast %cst_15 : f32 to vector<128x128xf32>
    %23 = arith.maximumf %21, %22 : vector<128x128xf32>
    %24 = arith.truncf %23 : vector<128x128xf32> to vector<128x128xbf16>
    %c0_16 = arith.constant 0 : index
    %c0_17 = arith.constant 0 : index
    %25 = vector.load %arg5[%c0_16, %c0_17] : memref<128x1xbf16, #tpu.memory_space<vmem>>, vector<128x1xbf16>
    %cst_18 = arith.constant dense<0.000000e+00> : vector<128x1xf32>
    %26 = tpu.matmul %24, %25, %cst_18 {dimension_numbers = #tpu.dot_dimension_numbers<[1], [0], [0], [1], [0, 0, 1, 1], [], []>} : vector<128x128xbf16>, vector<128x1xbf16>, vector<128x1xf32> -> vector<128x1xf32>
    %27 = tpu.transpose %26, [1, 0] : vector<128x1xf32> -> vector<1x128xf32>
    %c0_19 = arith.constant 0 : index
    %c0_20 = arith.constant 0 : index
    %28 = memref.load %arg7[%c0_19, %c0_20] : memref<1x1xf32, #tpu.memory_space<smem>>
    %29 = vector.broadcast %28 : f32 to vector<1x128xf32>
    %30 = arith.addf %27, %29 : vector<1x128xf32>
    %cst_21 = arith.constant 0.000000e+00 : f32
    %31 = vector.broadcast %cst_21 : f32 to vector<1x128xf32>
    %32 = arith.maximumf %30, %31 : vector<1x128xf32>
    %c0_22 = arith.constant 0 : index
    %c0_23 = arith.constant 0 : index
    %33 = vector.load %arg8[%c0_22, %c0_23] : memref<1x128xf32, #tpu.memory_space<vmem>>, vector<1x128xf32>
    tpu.vector_store %arg8[%c0_22, %c0_23], %32 {strides = array<i32>} : memref<1x128xf32, #tpu.memory_space<vmem>>, vector<1x128xf32>,
    return
  }
  func.func @transform_0(%arg0: i32) -> (i32, i32) {
    %c0_i32 = arith.constant 0 : i32
    %c0_i32_0 = arith.constant 0 : i32
    return %arg0, %c0_i32 : i32, i32
  }
  func.func @transform_1(%arg0: i32) -> (i32, i32) {
    %c0_i32 = arith.constant 0 : i32
    %c0_i32_0 = arith.constant 0 : i32
    %c0_i32_1 = arith.constant 0 : i32
    return %c0_i32, %c0_i32_0 : i32, i32
  }
  func.func @transform_2(%arg0: i32) -> (i32, i32) {
    %c0_i32 = arith.constant 0 : i32
    %c0_i32_0 = arith.constant 0 : i32
    %c0_i32_1 = arith.constant 0 : i32
    return %c0_i32, %c0_i32_0 : i32, i32
  }
  func.func @transform_3(%arg0: i32) -> (i32, i32) {
    %c0_i32 = arith.constant 0 : i32
    %c0_i32_0 = arith.constant 0 : i32
    %c0_i32_1 = arith.constant 0 : i32
    return %c0_i32, %c0_i32_0 : i32, i32
  }
  func.func @transform_4(%arg0: i32) -> (i32, i32) {
    %c0_i32 = arith.constant 0 : i32
    %c0_i32_0 = arith.constant 0 : i32
    %c0_i32_1 = arith.constant 0 : i32
    return %c0_i32, %c0_i32_0 : i32, i32
  }
  func.func @transform_5(%arg0: i32) -> (i32, i32) {
    %c0_i32 = arith.constant 0 : i32
    %c0_i32_0 = arith.constant 0 : i32
    %c0_i32_1 = arith.constant 0 : i32
    return %c0_i32, %c0_i32_0 : i32, i32
  }
  func.func @transform_6(%arg0: i32) -> (i32, i32) {
    %c0_i32 = arith.constant 0 : i32
    %c0_i32_0 = arith.constant 0 : i32
    %c0_i32_1 = arith.constant 0 : i32
    return %c0_i32, %c0_i32_0 : i32, i32
  }
  func.func @transform_7(%arg0: i32) -> (i32, i32) {
    %c0_i32 = arith.constant 0 : i32
    %c0_i32_0 = arith.constant 0 : i32
    return %c0_i32, %arg0 : i32, i32
  }
}

</mosaic_0001>

<llo_original>
// kernel: tpu_custom_call.1
$region0: #{tpu_custom_call.1}
  #allocation0 [shape = 'u32[]', space=smem, size = 0x4, offset = 0x4, fixed_abs, tag = 'smem constant byte address 0x4 - core index']
  #allocation1 [shape = 'u32[144,128]{1,0:T(1,128)}', space=vmem, size = 0x12000, scoped, tag = 'internal scratch']
  #allocation2 [shape = 'f32[1,1]{1,0:T(1,128)S(6)}', space=smem, size = 0x200, scoped, tag = 'scoped memory for tpu_custom_call.1']
  %s0 = inlined_call_operand.vmem [shape: f32[384,16], index: 0, kind: input, shape index: {}]
  %s1 = inlined_call_operand.vmem [shape: f32[16,128], index: 1, kind: input, shape index: {}]
  %s2 = inlined_call_operand.vmem [shape: bf16[128,128], index: 2, kind: input, shape index: {}]
  %s3 = inlined_call_operand.vmem [shape: bf16[128,128], index: 3, kind: input, shape index: {}]
  %s4 = inlined_call_operand.vmem [shape: bf16[128,1], index: 4, kind: input, shape index: {}]
  %s5 = inlined_call_operand.vmem [shape: f32[3,128], index: 5, kind: input, shape index: {}]
  %s6 = inlined_call_operand.<no memory space> [shape: f32[1,1], index: 6, kind: input, shape index: {}]
  %s7 = inlined_call_operand.hbm [shape: f32[1,384], index: 7, kind: output, shape index: {}]
  %s8 = sld [smem:[#allocation0]]
  $region61: #{tpu_custom_call.1} parent=0
    _
  %s10 = ssub.s32 1, %s8
  %s11 = scalar_select 0, %s10, %s8
  %12 = sst [smem:[#allocation2]] %s6
  $region1: #{tpu_custom_call.1} parent=0
    #allocation3 [shape = 'u8[1024]{0}', space=vmem, size = 0x400, scoped, tag = 'output window, operand 0']
    #allocation4 [shape = 's32[2]{0}', space=sflag, size = 0x8, scoped, tag = 'scoped memory for tpu_custom_call.1']
    %13 = vsyncpa [#allocation4], 0
    %s14 = scalar_lea.sflag [#allocation4], 1
    %15 = vsyncpa %s14, 0
    loop: start=0, step=1, limit=5
    $region2: #{tpu_custom_call.1} parent=1 // loop_pre_header
      _
    $region3: #{tpu_custom_call.1} parent=1 // loop_header
      %s17 = sphi 0, %s21
      %p18 = scmp.ge.s32.totalorder %s17, 5
      %s27 = sphi 0, %s29
      %s30 = sphi 0, %s27
      %s31 = sphi 0, %s30
      %s47 = sphi 0, %s31
      %s51 = sphi 0, %s51
      %s53 = sphi 0, %s51
      %s54 = sphi 0, %s53
      %s68 = sphi 0, %s54
      %s72 = sphi 0, %s72
      %s74 = sphi 0, %s72
      %s75 = sphi 0, %s74
      %s89 = sphi 0, %s75
      %s93 = sphi 0, %s93
      %s95 = sphi 0, %s93
      %s96 = sphi 0, %s95
      %s110 = sphi 0, %s96
      %s114 = sphi 0, %s114
      %s116 = sphi 0, %s114
      %s117 = sphi 0, %s116
      %s131 = sphi 0, %s117
      %s135 = sphi 0, %s135
      %s137 = sphi 0, %s135
      %s138 = sphi 0, %s137
      %s152 = sphi 0, %s138
      %s156 = sphi 0, %s156
      %s158 = sphi 0, %s156
      %s159 = sphi 0, %s158
      %s173 = sphi 0, %s159
      %s179 = sphi 0, %s181
      %s182 = sphi 0, %s179
      %s183 = sphi 0, %s182
      %s199 = sphi 0, %s183
    $region4: #{tpu_custom_call.1} parent=1 // loop_header_branch
      %20 = sbr.rel (%p18) target = $region8
    $region5: #{tpu_custom_call.1} parent=1 // loop_body
      %s22 = ssub.s32 %s17, 1
      %s23 = ssub.s32 %s17, 2
      %s24 = sadd.s32 %s17, 1
      %s25 = ssub.s32 %s17, %s24
      %p26 = scmp.eq.s32.totalorder %s25, 0
      %s28 = sadd.s32 %s27, 1
      %s29 = scalar_select %p26, %s27, %s28
      %p32 = pneg %p26
      %p33 = scmp.eq.s32.totalorder %s17, 2
      %p34 = por %p32, %p33
      %p35 = scmp.ne.s32.totalorder %s27, %s30
      %p36 = scmp.eq.s32.totalorder %s17, 0
      %p37 = por %p35, %p36
      %p38 = scmp.ne.s32.totalorder %s27, %s30
      %p39 = scmp.eq.s32.totalorder %s22, 2
      %p40 = por %p38, %p39
      %p41 = scmp.ne.s32.totalorder %s30, %s31
      %p42 = scmp.eq.s32.totalorder %s22, 0
      %p43 = por %p41, %p42
      %p44 = scmp.ne.s32.totalorder %s30, %s31
      %p45 = scmp.eq.s32.totalorder %s23, 2
      %p46 = por %p44, %p45
      %p48 = scmp.ne.s32.totalorder %s31, %s47
      %p49 = scmp.eq.s32.totalorder %s23, 0
      %p50 = por %p48, %p49
      %s52 = sadd.s32 %s51, 1
      %p55 = scmp.eq.s32.totalorder %s17, 2
      %p56 = scmp.ne.s32.totalorder %s51, %s53
      %p57 = scmp.eq.s32.totalorder %s17, 0
      %p58 = por %p56, %p57
      %p59 = scmp.ne.s32.totalorder %s51, %s53
      %p60 = scmp.eq.s32.totalorder %s22, 2
      %p61 = por %p59, %p60
      %p62 = scmp.ne.s32.totalorder %s53, %s54
      %p63 = scmp.eq.s32.totalorder %s22, 0
      %p64 = por %p62, %p63
      %p65 = scmp.ne.s32.totalorder %s53, %s54
      %p66 = scmp.eq.s32.totalorder %s23, 2
      %p67 = por %p65, %p66
      %p69 = scmp.ne.s32.totalorder %s54, %s68
      %p70 = scmp.eq.s32.totalorder %s23, 0
      %p71 = por %p69, %p70
      %s73 = sadd.s32 %s72, 1
      %p76 = scmp.eq.s32.totalorder %s17, 2
      %p77 = scmp.ne.s32.totalorder %s72, %s74
      %p78 = scmp.eq.s32.totalorder %s17, 0
      %p79 = por %p77, %p78
      %p80 = scmp.ne.s32.totalorder %s72, %s74
      %p81 = scmp.eq.s32.totalorder %s22, 2
      %p82 = por %p80, %p81
      %p83 = scmp.ne.s32.totalorder %s74, %s75
      %p84 = scmp.eq.s32.totalorder %s22, 0
      %p85 = por %p83, %p84
      %p86 = scmp.ne.s32.totalorder %s74, %s75
      %p87 = scmp.eq.s32.totalorder %s23, 2
      %p88 = por %p86, %p87
      %p90 = scmp.ne.s32.totalorder %s75, %s89
      %p91 = scmp.eq.s32.totalorder %s23, 0
      %p92 = por %p90, %p91
      %s94 = sadd.s32 %s93, 1
      %p97 = scmp.eq.s32.totalorder %s17, 2
      %p98 = scmp.ne.s32.totalorder %s93, %s95
      %p99 = scmp.eq.s32.totalorder %s17, 0
      %p100 = por %p98, %p99
      %p101 = scmp.ne.s32.totalorder %s93, %s95
      %p102 = scmp.eq.s32.totalorder %s22, 2
      %p103 = por %p101, %p102
      %p104 = scmp.ne.s32.totalorder %s95, %s96
      %p105 = scmp.eq.s32.totalorder %s22, 0
      %p106 = por %p104, %p105
      %p107 = scmp.ne.s32.totalorder %s95, %s96
      %p108 = scmp.eq.s32.totalorder %s23, 2
      %p109 = por %p107, %p108
      %p111 = scmp.ne.s32.totalorder %s96, %s110
      %p112 = scmp.eq.s32.totalorder %s23, 0
      %p113 = por %p111, %p112
      %s115 = sadd.s32 %s114, 1
      %p118 = scmp.eq.s32.totalorder %s17, 2
      %p119 = scmp.ne.s32.totalorder %s114, %s116
      %p120 = scmp.eq.s32.totalorder %s17, 0
      %p121 = por %p119, %p120
      %p122 = scmp.ne.s32.totalorder %s114, %s116
      %p123 = scmp.eq.s32.totalorder %s22, 2
      %p124 = por %p122, %p123
      %p125 = scmp.ne.s32.totalorder %s116, %s117
      %p126 = scmp.eq.s32.totalorder %s22, 0
      %p127 = por %p125, %p126
      %p128 = scmp.ne.s32.totalorder %s116, %s117
      %p129 = scmp.eq.s32.totalorder %s23, 2
      %p130 = por %p128, %p129
      %p132 = scmp.ne.s32.totalorder %s117, %s131
      %p133 = scmp.eq.s32.totalorder %s23, 0
      %p134 = por %p132, %p133
      %s136 = sadd.s32 %s135, 1
      %p139 = scmp.eq.s32.totalorder %s17, 2
      %p140 = scmp.ne.s32.totalorder %s135, %s137
      %p141 = scmp.eq.s32.totalorder %s17, 0
      %p142 = por %p140, %p141
      %p143 = scmp.ne.s32.totalorder %s135, %s137
      %p144 = scmp.eq.s32.totalorder %s22, 2
      %p145 = por %p143, %p144
      %p146 = scmp.ne.s32.totalorder %s137, %s138
      %p147 = scmp.eq.s32.totalorder %s22, 0
      %p148 = por %p146, %p147
      %p149 = scmp.ne.s32.totalorder %s137, %s138
      %p150 = scmp.eq.s32.totalorder %s23, 2
      %p151 = por %p149, %p150
      %p153 = scmp.ne.s32.totalorder %s138, %s152
      %p154 = scmp.eq.s32.totalorder %s23, 0
      %p155 = por %p153, %p154
      %s157 = sadd.s32 %s156, 1
      %p160 = scmp.eq.s32.totalorder %s17, 2
      %p161 = scmp.ne.s32.totalorder %s156, %s158
      %p162 = scmp.eq.s32.totalorder %s17, 0
      %p163 = por %p161, %p162
      %p164 = scmp.ne.s32.totalorder %s156, %s158
      %p165 = scmp.eq.s32.totalorder %s22, 2
      %p166 = por %p164, %p165
      %p167 = scmp.ne.s32.totalorder %s158, %s159
      %p168 = scmp.eq.s32.totalorder %s22, 0
      %p169 = por %p167, %p168
      %p170 = scmp.ne.s32.totalorder %s158, %s159
      %p171 = scmp.eq.s32.totalorder %s23, 2
      %p172 = por %p170, %p171
      %p174 = scmp.ne.s32.totalorder %s159, %s173
      %p175 = scmp.eq.s32.totalorder %s23, 0
      %p176 = por %p174, %p175
      %s177 = ssub.s32 %s17, %s24
      %p178 = scmp.eq.s32.totalorder %s177, 0
      %s180 = sadd.s32 %s179, 1
      %s181 = scalar_select %p178, %s179, %s180
      %p184 = pneg %p178
      %p185 = scmp.eq.s32.totalorder %s17, 2
      %p186 = por %p184, %p185
      %p187 = scmp.ne.s32.totalorder %s179, %s182
      %p188 = scmp.eq.s32.totalorder %s17, 0
      %p189 = por %p187, %p188
      %p190 = scmp.ne.s32.totalorder %s179, %s182
      %p191 = scmp.eq.s32.totalorder %s22, 2
      %p192 = por %p190, %p191
      %p193 = scmp.ne.s32.totalorder %s182, %s183
      %p194 = scmp.eq.s32.totalorder %s22, 0
      %p195 = por %p193, %p194
      %p196 = scmp.ne.s32.totalorder %s182, %s183
      %p197 = scmp.eq.s32.totalorder %s23, 2
      %p198 = por %p196, %p197
      %p200 = scmp.ne.s32.totalorder %s183, %s199
      %p201 = scmp.eq.s32.totalorder %s23, 0
      %p202 = por %p200, %p201
      %p203 = scmp.le.s32.totalorder 1, %s17
      %p204 = scmp.lt.s32.totalorder %s17, 4
      %p205 = pnand %p203, %p204
      %p206 = pneg %p205
      // Predicated region
      $region9: #{tpu_custom_call.1} parent=5 // pred_check
        _
      $region10: #{tpu_custom_call.1} parent=5 // pred_check_branch
        %208 = sbr.rel (%p205) target = $region12
      $region11: #{tpu_custom_call.1} parent=5 // pred_region
        %s209 = ssub.s32 %s17, 1
        // Predicated region
        $region13: #{tpu_custom_call.1} parent=11 // pred_check
          %p210 = pneg %p64
        $region14: #{tpu_custom_call.1} parent=11 // pred_check_branch
          %212 = sbr.rel (%p210) target = $region16
        $region15: #{tpu_custom_call.1} parent=11 // pred_region
          _
        $region16: #{tpu_custom_call.1} parent=11 // pred_fallthru
          _
        // Predicated region
        $region17: #{tpu_custom_call.1} parent=11 // pred_check
          %p213 = pneg %p85
        $region18: #{tpu_custom_call.1} parent=11 // pred_check_branch
          %215 = sbr.rel (%p213) target = $region20
        $region19: #{tpu_custom_call.1} parent=11 // pred_region
          _
        $region20: #{tpu_custom_call.1} parent=11 // pred_fallthru
          _
        // Predicated region
        $region21: #{tpu_custom_call.1} parent=11 // pred_check
          %p216 = pneg %p106
        $region22: #{tpu_custom_call.1} parent=11 // pred_check_branch
          %218 = sbr.rel (%p216) target = $region24
        $region23: #{tpu_custom_call.1} parent=11 // pred_region
          _
        $region24: #{tpu_custom_call.1} parent=11 // pred_fallthru
          _
        // Predicated region
        $region25: #{tpu_custom_call.1} parent=11 // pred_check
          %p219 = pneg %p127
        $region26: #{tpu_custom_call.1} parent=11 // pred_check_branch
          %221 = sbr.rel (%p219) target = $region28
        $region27: #{tpu_custom_call.1} parent=11 // pred_region
          _
        $region28: #{tpu_custom_call.1} parent=11 // pred_fallthru
          _
        // Predicated region
        $region29: #{tpu_custom_call.1} parent=11 // pred_check
          %p222 = pneg %p148
        $region30: #{tpu_custom_call.1} parent=11 // pred_check_branch
          %224 = sbr.rel (%p222) target = $region32
        $region31: #{tpu_custom_call.1} parent=11 // pred_region
          _
        $region32: #{tpu_custom_call.1} parent=11 // pred_fallthru
          _
        // Predicated region
        $region33: #{tpu_custom_call.1} parent=11 // pred_check
          %p225 = pneg %p169
        $region34: #{tpu_custom_call.1} parent=11 // pred_check_branch
          %227 = sbr.rel (%p225) target = $region36
        $region35: #{tpu_custom_call.1} parent=11 // pred_region
          _
        $region36: #{tpu_custom_call.1} parent=11 // pred_fallthru
          _
      $region12: #{tpu_custom_call.1} parent=5 // pred_fallthru
        _
      %p228 = scmp.lt.s32.totalorder %s17, 3
      // Predicated region
      $region37: #{tpu_custom_call.1} parent=5 // pred_check
        %p229 = pneg %p228
      $region38: #{tpu_custom_call.1} parent=5 // pred_check_branch
        %231 = sbr.rel (%p229) target = $region40
      $region39: #{tpu_custom_call.1} parent=5 // pred_region
        // Predicated region
        $region41: #{tpu_custom_call.1} parent=39 // pred_check
          %p232 = pneg %p37
        $region42: #{tpu_custom_call.1} parent=39 // pred_check_branch
          %234 = sbr.rel (%p232) target = $region44
        $region43: #{tpu_custom_call.1} parent=39 // pred_region
          %s235 = smul.u32 16, %s17
          %p236 = scmp.lt.s32.totalorder %s235, 47
          %s237 = scalar_select %p236, %s235, 47
          %s238 = smul.addr %s237, 8
          %s239 = scalar_lea.vmem %s0, %s238
          %s240 = smul.u32 16, %s17
        $region44: #{tpu_custom_call.1} parent=39 // pred_fallthru
          _
      $region40: #{tpu_custom_call.1} parent=5 // pred_fallthru
        _
      %p241 = scmp.le.s32.totalorder 1, %s17
      %p242 = scmp.lt.s32.totalorder %s17, 4
      %p243 = pnand %p241, %p242
      %p244 = pneg %p243
      // Predicated region
      $region45: #{tpu_custom_call.1} parent=5 // pred_check
        _
      $region46: #{tpu_custom_call.1} parent=5 // pred_check_branch
        %246 = sbr.rel (%p243) target = $region48
      $region47: #{tpu_custom_call.1} parent=5 // pred_region
        %s247 = ssub.s32 %s17, 1
        %s248 = smul.u32 16, %s22
        %p249 = scmp.lt.s32.totalorder %s248, 47
        %s250 = scalar_select %p249, %s248, 47
        %s251 = smul.addr %s250, 8
        %s252 = scalar_lea.vmem %s0, %s251
        %p253 = pneg %p43
        %p254 = pneg %p40
        %p255 = pneg %p64
        %p256 = pneg %p61
        %p257 = pneg %p85
        %p258 = pneg %p82
        %p259 = pneg %p106
        %p260 = pneg %p103
        %p261 = pneg %p127
        %p262 = pneg %p124
        %p263 = pneg %p148
        %p264 = pneg %p145
        %p265 = pneg %p169
        %p266 = pneg %p166
        %p267 = pneg %p195
        %p268 = pneg %p192
        %s269 = sand.u32 %s182, 1
        %s270 = scalar_lea.sflag [#allocation4], %s269
        %s271 = sand.u32 %s182, 1
        %s272 = scalar_lea.vmem [#allocation3], %s271
        %s273 = smul.u32 16, %s22
        %p274 = scmp.lt.s32.totalorder %s273, 47
        %s275 = scalar_select %p274, %s273, 47
        %s276 = smul.addr %s275, 8
        %s277 = scalar_lea.vmem %s0, %s276
        %s278 = smul.u32 16, %s22
        %v280 = vld [vmem:[%s277] sm:$0xff]
        %v281 = vld [vmem:[%s277 + $0x8] sm:$0xff]
        %v282 = vld [vmem:[%s277 + $0x10] sm:$0xff]
        %v283 = vld [vmem:[%s277 + $0x18] sm:$0xff]
        %v284 = vld [vmem:[%s277 + $0x20] sm:$0xff]
        %v285 = vld [vmem:[%s277 + $0x28] sm:$0xff]
        %v286 = vld [vmem:[%s277 + $0x30] sm:$0xff]
        %v287 = vld [vmem:[%s277 + $0x38] sm:$0xff]
        %v288 = vld [vmem:[%s277 + $0x40] sm:$0xff]
        %v289 = vld [vmem:[%s277 + $0x48] sm:$0xff]
        %v290 = vld [vmem:[%s277 + $0x50] sm:$0xff]
        %v291 = vld [vmem:[%s277 + $0x58] sm:$0xff]
        %v292 = vld [vmem:[%s277 + $0x60] sm:$0xff]
        %v293 = vld [vmem:[%s277 + $0x68] sm:$0xff]
        %v294 = vld [vmem:[%s277 + $0x70] sm:$0xff]
        %v295 = vld [vmem:[%s277 + $0x78] sm:$0xff]
        %v296 = vld [vmem:[%s1] sm:$0xff]
        %v297 = vld [vmem:[%s1 + $0x8] sm:$0xff]
        %v298 = vld [vmem:[%s5] sm:$0x1]
        %v299 = vlaneseq
        %v300 = vshrl.u32 %v299, 7
        %v301 = vsub.s32 0, %v300
        %v302 = vrot.slane %v298, %v301
        %vm303 = vcmask 130048
        %v305 = vsel %vm303, %v280, 0
        %v308 = vsel %vm303, %v281, 0
        %v311 = vsel %vm303, %v282, 0
        %v314 = vsel %vm303, %v283, 0
        %v317 = vsel %vm303, %v284, 0
        %v320 = vsel %vm303, %v285, 0
        %v323 = vsel %vm303, %v286, 0
        %v326 = vsel %vm303, %v287, 0
        %v329 = vsel %vm303, %v288, 0
        %v332 = vsel %vm303, %v289, 0
        %v335 = vsel %vm303, %v290, 0
        %v338 = vsel %vm303, %v291, 0
        %v341 = vsel %vm303, %v292, 0
        %v344 = vsel %vm303, %v293, 0
        %v347 = vsel %vm303, %v294, 0
        %v350 = vsel %vm303, %v295, 0
        %352 = vmatprep.subr.mxu0 0.0
        %353 = vmatpush1.msra.mxu0 %v296
        %354 = vmatprep.subr.mxu0 0.0
        %355 = vmatpush1.msra.mxu0 %v297
        %356 = vmatprep.subr.mxu0 0.0
        %357 = vmatpush1.msra.mxu0 0.0
        %358 = vmatprep.subr.mxu0 0.0
        %359 = vmatpush1.msra.mxu0 0.0
        %360 = vmatprep.subr.mxu0 0.0
        %361 = vmatpush1.msra.mxu0 0.0
        %362 = vmatprep.subr.mxu0 0.0
        %363 = vmatpush1.msra.mxu0 0.0
        %364 = vmatprep.subr.mxu0 0.0
        %365 = vmatpush1.msra.mxu0 0.0
        %366 = vmatprep.subr.mxu0 0.0
        %367 = vmatpush1.msra.mxu0 0.0
        %368 = vmatprep.subr.mxu0 0.0
        %369 = vmatpush1.msra.mxu0 0.0
        %370 = vmatprep.subr.mxu0 0.0
        %371 = vmatpush1.msra.mxu0 0.0
        %372 = vmatprep.subr.mxu0 0.0
        %373 = vmatpush1.msra.mxu0 0.0
        %374 = vmatprep.subr.mxu0 0.0
        %375 = vmatpush1.msra.mxu0 0.0
        %376 = vmatprep.subr.mxu0 0.0
        %377 = vmatpush1.msra.mxu0 0.0
        %378 = vmatprep.subr.mxu0 0.0
        %379 = vmatpush1.msra.mxu0 0.0
        %380 = vmatprep.subr.mxu0 0.0
        %381 = vmatpush1.msra.mxu0 0.0
        %382 = vmatprep.subr.mxu0 0.0
        %383 = vmatpush1.msra.mxu0 0.0
        %384 = vmatprep.subr.mxu0 0.0
        %385 = vmatpush1.msra.mxu0 0.0
        %386 = vmatprep.subr.mxu0 0.0
        %387 = vmatpush1.msra.mxu0 0.0
        %388 = vmatprep.subr.mxu0 0.0
        %389 = vmatpush1.msra.mxu0 0.0
        %390 = vmatprep.subr.mxu0 0.0
        %391 = vmatpush1.msra.mxu0 0.0
        %392 = vmatprep.subr.mxu0 0.0
        %393 = vmatpush1.msra.mxu0 0.0
        %394 = vmatprep.subr.mxu0 0.0
        %395 = vmatpush1.msra.mxu0 0.0
        %396 = vmatprep.subr.mxu0 0.0
        %397 = vmatpush1.msra.mxu0 0.0
        %398 = vmatprep.subr.mxu0 0.0
        %399 = vmatpush1.msra.mxu0 0.0
        %400 = vmatprep.subr.mxu0 0.0
        %401 = vmatpush1.msra.mxu0 0.0
        %402 = vmatprep.subr.mxu0 0.0
        %403 = vmatpush1.msra.mxu0 0.0
        %404 = vmatprep.subr.mxu0 0.0
        %405 = vmatpush1.msra.mxu0 0.0
        %406 = vmatprep.subr.mxu0 0.0
        %407 = vmatpush1.msra.mxu0 0.0
        %408 = vmatprep.subr.mxu0 0.0
        %409 = vmatpush1.msra.mxu0 0.0
        %410 = vmatprep.subr.mxu0 0.0
        %411 = vmatpush1.msra.mxu0 0.0
        %412 = vmatprep.subr.mxu0 0.0
        %413 = vmatpush1.msra.mxu0 0.0
        %414 = vmatprep.subr.mxu0 0.0
        %415 = vmatpush1.msra.mxu0 0.0
        %416 = vmatprep.mubr.f32.mxu0 0.0
        %417 = vmatmul.mubr.f32.gmra.mrb[0].mxu0 %v305
        %v418 = vpop.f32.mrb[0].mxu0
        %v419 = vadd.f32 %v302, %v418
        %v420 = vpop.f32.mrb[0].mxu0
        %421 = vmatprep.mubr.f32.mxu0 0.0
        %422 = vmatmul.mubr.f32.gmra.mrb[0].mxu0 %v308
        %v423 = vpop.f32.mrb[0].mxu0
        %v424 = vadd.f32 %v302, %v423
        %v425 = vpop.f32.mrb[0].mxu0
        %426 = vmatprep.mubr.f32.mxu0 0.0
        %427 = vmatmul.mubr.f32.gmra.mrb[0].mxu0 %v311
        %v428 = vpop.f32.mrb[0].mxu0
        %v429 = vadd.f32 %v302, %v428
        %v430 = vpop.f32.mrb[0].mxu0
        %431 = vmatprep.mubr.f32.mxu0 0.0
        %432 = vmatmul.mubr.f32.gmra.mrb[0].mxu0 %v314
        %v433 = vpop.f32.mrb[0].mxu0
        %v434 = vadd.f32 %v302, %v433
        %v435 = vpop.f32.mrb[0].mxu0
        %436 = vmatprep.mubr.f32.mxu0 0.0
        %437 = vmatmul.mubr.f32.gmra.mrb[0].mxu0 %v317
        %v438 = vpop.f32.mrb[0].mxu0
        %v439 = vadd.f32 %v302, %v438
        %v440 = vpop.f32.mrb[0].mxu0
        %441 = vmatprep.mubr.f32.mxu0 0.0
        %442 = vmatmul.mubr.f32.gmra.mrb[0].mxu0 %v320
        %v443 = vpop.f32.mrb[0].mxu0
        %v444 = vadd.f32 %v302, %v443
        %v445 = vpop.f32.mrb[0].mxu0
        %446 = vmatprep.mubr.f32.mxu0 0.0
        %447 = vmatmul.mubr.f32.gmra.mrb[0].mxu0 %v323
        %v448 = vpop.f32.mrb[0].mxu0
        %v449 = vadd.f32 %v302, %v448
        %v450 = vpop.f32.mrb[0].mxu0
        %451 = vmatprep.mubr.f32.mxu0 0.0
        %452 = vmatmul.mubr.f32.gmra.mrb[0].mxu0 %v326
        %v453 = vpop.f32.mrb[0].mxu0
        %v454 = vadd.f32 %v302, %v453
        %v455 = vpop.f32.mrb[0].mxu0
        %456 = vmatprep.mubr.f32.mxu0 0.0
        %457 = vmatmul.mubr.f32.gmra.mrb[0].mxu0 %v329
        %v458 = vpop.f32.mrb[0].mxu0
        %v459 = vadd.f32 %v302, %v458
        %v460 = vpop.f32.mrb[0].mxu0
        %461 = vmatprep.mubr.f32.mxu0 0.0
        %462 = vmatmul.mubr.f32.gmra.mrb[0].mxu0 %v332
        %v463 = vpop.f32.mrb[0].mxu0
        %v464 = vadd.f32 %v302, %v463
        %v465 = vpop.f32.mrb[0].mxu0
        %466 = vmatprep.mubr.f32.mxu0 0.0
        %467 = vmatmul.mubr.f32.gmra.mrb[0].mxu0 %v335
        %v468 = vpop.f32.mrb[0].mxu0
        %v469 = vadd.f32 %v302, %v468
        %v470 = vpop.f32.mrb[0].mxu0
        %471 = vmatprep.mubr.f32.mxu0 0.0
        %472 = vmatmul.mubr.f32.gmra.mrb[0].mxu0 %v338
        %v473 = vpop.f32.mrb[0].mxu0
        %v474 = vadd.f32 %v302, %v473
        %v475 = vpop.f32.mrb[0].mxu0
        %476 = vmatprep.mubr.f32.mxu0 0.0
        %477 = vmatmul.mubr.f32.gmra.mrb[0].mxu0 %v341
        %v478 = vpop.f32.mrb[0].mxu0
        %v479 = vadd.f32 %v302, %v478
        %v480 = vpop.f32.mrb[0].mxu0
        %481 = vmatprep.mubr.f32.mxu0 0.0
        %482 = vmatmul.mubr.f32.gmra.mrb[0].mxu0 %v344
        %v483 = vpop.f32.mrb[0].mxu0
        %v484 = vadd.f32 %v302, %v483
        %v485 = vpop.f32.mrb[0].mxu0
        %486 = vmatprep.mubr.f32.mxu0 0.0
        %487 = vmatmul.mubr.f32.gmra.mrb[0].mxu0 %v347
        %v488 = vpop.f32.mrb[0].mxu0
        %v489 = vadd.f32 %v302, %v488
        %v490 = vpop.f32.mrb[0].mxu0
        %491 = vmatprep.mubr.f32.mxu0 0.0
        %492 = vmatmul.mubr.f32.gmra.mrb[0].mxu0 %v350
        %v493 = vpop.f32.mrb[0].mxu0
        %v494 = vadd.f32 %v302, %v493
        %v495 = vpop.f32.mrb[0].mxu0
        %496 = vdwg.mxu0
        %v497 = vmax.f32 %v419, 0.0
        %v498 = vmax.f32 %v424, 0.0
        %v499 = vmax.f32 %v429, 0.0
        %v500 = vmax.f32 %v434, 0.0
        %v501 = vmax.f32 %v439, 0.0
        %v502 = vmax.f32 %v444, 0.0
        %v503 = vmax.f32 %v449, 0.0
        %v504 = vmax.f32 %v454, 0.0
        %v505 = vmax.f32 %v459, 0.0
        %v506 = vmax.f32 %v464, 0.0
        %v507 = vmax.f32 %v469, 0.0
        %v508 = vmax.f32 %v474, 0.0
        %v509 = vmax.f32 %v479, 0.0
        %v510 = vmax.f32 %v484, 0.0
        %v511 = vmax.f32 %v489, 0.0
        %v512 = vmax.f32 %v494, 0.0
        %v513 = vpack.c.bf16 %v498, %v497
        %v514 = vpack.c.bf16 %v500, %v499
        %v515 = vpack.c.bf16 %v502, %v501
        %v516 = vpack.c.bf16 %v504, %v503
        %v517 = vpack.c.bf16 %v506, %v505
        %v518 = vpack.c.bf16 %v508, %v507
        %v519 = vpack.c.bf16 %v510, %v509
        %v520 = vpack.c.bf16 %v512, %v511
        %v521 = vld [vmem:[%s2] sm:$0xf]
        %v522 = vld [vmem:[%s2 + $0x4] sm:$0xf]
        %v523 = vld [vmem:[%s2 + $0x8] sm:$0xf]
        %v524 = vld [vmem:[%s2 + $0xc] sm:$0xf]
        %v525 = vld [vmem:[%s2 + $0x10] sm:$0xf]
        %v526 = vld [vmem:[%s2 + $0x14] sm:$0xf]
        %v527 = vld [vmem:[%s2 + $0x18] sm:$0xf]
        %v528 = vld [vmem:[%s2 + $0x1c] sm:$0xf]
        %v529 = vld [vmem:[%s2 + $0x20] sm:$0xf]
        %v530 = vld [vmem:[%s2 + $0x24] sm:$0xf]
        %v531 = vld [vmem:[%s2 + $0x28] sm:$0xf]
        %v532 = vld [vmem:[%s2 + $0x2c] sm:$0xf]
        %v533 = vld [vmem:[%s2 + $0x30] sm:$0xf]
        %v534 = vld [vmem:[%s2 + $0x34] sm:$0xf]
        %v535 = vld [vmem:[%s2 + $0x38] sm:$0xf]
        %v536 = vld [vmem:[%s2 + $0x3c] sm:$0xf]
        %v537 = vld [vmem:[%s5 + $0x1] sm:$0x1]
        %v538 = vlaneseq
        %v539 = vshrl.u32 %v538, 7
        %v540 = vsub.s32 0, %v539
        %v541 = vrot.slane %v537, %v540
        %v558 = vunpack.c.l.b16 %v521
        %v559 = vunpack.c.l.b16 %v522
        %v560 = vunpack.c.l.b16 %v523
        %v561 = vunpack.c.l.b16 %v524
        %v562 = vunpack.c.l.b16 %v525
        %v563 = vunpack.c.l.b16 %v526
        %v564 = vunpack.c.l.b16 %v527
        %v565 = vunpack.c.l.b16 %v528
        %v566 = vunpack.c.l.b16 %v529
        %v567 = vunpack.c.l.b16 %v530
        %v568 = vunpack.c.l.b16 %v531
        %v569 = vunpack.c.l.b16 %v532
        %v570 = vunpack.c.l.b16 %v533
        %v571 = vunpack.c.l.b16 %v534
        %v572 = vunpack.c.l.b16 %v535
        %v573 = vunpack.c.l.b16 %v536
        %v574 = vpack.c.b16 %v559, %v558
        %v575 = vpack.c.b16 %v561, %v560
        %v576 = vpack.c.b16 %v563, %v562
        %v577 = vpack.c.b16 %v565, %v564
        %v578 = vpack.c.b16 %v567, %v566
        %v579 = vpack.c.b16 %v569, %v568
        %v580 = vpack.c.b16 %v571, %v570
        %v581 = vpack.c.b16 %v573, %v572
        %590 = vmatprep.subr.bf16.mxu0 0
        %591 = vmatpush1.bf16.msra.mxu0 %v574
        %592 = vmatprep.subr.bf16.mxu0 0
        %593 = vmatpush1.bf16.msra.mxu0 %v575
        %594 = vmatprep.subr.bf16.mxu0 0
        %595 = vmatpush1.bf16.msra.mxu0 %v576
        %596 = vmatprep.subr.bf16.mxu0 0
        %597 = vmatpush1.bf16.msra.mxu0 %v577
        %598 = vmatprep.subr.bf16.mxu0 0
        %599 = vmatpush1.bf16.msra.mxu0 %v578
        %600 = vmatprep.subr.bf16.mxu0 0
        %601 = vmatpush1.bf16.msra.mxu0 %v579
        %602 = vmatprep.subr.bf16.mxu0 0
        %603 = vmatpush1.bf16.msra.mxu0 %v580
        %604 = vmatprep.subr.bf16.mxu0 0
        %605 = vmatpush1.bf16.msra.mxu0 %v581
        %606 = vmatprep.subr.bf16.mxu0 0
        %607 = vmatpush1.bf16.msra.mxu0 0
        %608 = vmatprep.subr.bf16.mxu0 0
        %609 = vmatpush1.bf16.msra.mxu0 0
        %610 = vmatprep.subr.bf16.mxu0 0
        %611 = vmatpush1.bf16.msra.mxu0 0
        %612 = vmatprep.subr.bf16.mxu0 0
        %613 = vmatpush1.bf16.msra.mxu0 0
        %614 = vmatprep.subr.bf16.mxu0 0
        %615 = vmatpush1.bf16.msra.mxu0 0
        %616 = vmatprep.subr.bf16.mxu0 0
        %617 = vmatpush1.bf16.msra.mxu0 0
        %618 = vmatprep.subr.bf16.mxu0 0
        %619 = vmatpush1.bf16.msra.mxu0 0
        %620 = vmatprep.subr.bf16.mxu0 0
        %621 = vmatpush1.bf16.msra.mxu0 0
        %622 = vmatprep.mubr.bf16.mxu0 0
        %623 = vmatmul.mubr.bf16.gmra.mrb[0].mxu0 %v513
        %v624 = vpop.f32.mrb[0].mxu0
        %v625 = vadd.f32 %v541, %v624
        %v626 = vpop.f32.mrb[0].mxu0
        %v627 = vpop.f32.mrb[0].mxu0
        %v628 = vadd.f32 %v541, %v627
        %v629 = vpop.f32.mrb[0].mxu0
        %630 = vmatprep.mubr.bf16.mxu0 0
        %631 = vmatmul.mubr.bf16.gmra.mrb[0].mxu0 %v514
        %v632 = vpop.f32.mrb[0].mxu0
        %v633 = vadd.f32 %v541, %v632
        %v634 = vpop.f32.mrb[0].mxu0
        %v635 = vpop.f32.mrb[0].mxu0
        %v636 = vadd.f32 %v541, %v635
        %v637 = vpop.f32.mrb[0].mxu0
        %638 = vmatprep.mubr.bf16.mxu0 0
        %639 = vmatmul.mubr.bf16.gmra.mrb[0].mxu0 %v515
        %v640 = vpop.f32.mrb[0].mxu0
        %v641 = vadd.f32 %v541, %v640
        %v642 = vpop.f32.mrb[0].mxu0
        %v643 = vpop.f32.mrb[0].mxu0
        %v644 = vadd.f32 %v541, %v643
        %v645 = vpop.f32.mrb[0].mxu0
        %646 = vmatprep.mubr.bf16.mxu0 0
        %647 = vmatmul.mubr.bf16.gmra.mrb[0].mxu0 %v516
        %v648 = vpop.f32.mrb[0].mxu0
        %v649 = vadd.f32 %v541, %v648
        %v650 = vpop.f32.mrb[0].mxu0
        %v651 = vpop.f32.mrb[0].mxu0
        %v652 = vadd.f32 %v541, %v651
        %v653 = vpop.f32.mrb[0].mxu0
        %654 = vmatprep.mubr.bf16.mxu0 0
        %655 = vmatmul.mubr.bf16.gmra.mrb[0].mxu0 %v517
        %v656 = vpop.f32.mrb[0].mxu0
        %v657 = vadd.f32 %v541, %v656
        %v658 = vpop.f32.mrb[0].mxu0
        %v659 = vpop.f32.mrb[0].mxu0
        %v660 = vadd.f32 %v541, %v659
        %v661 = vpop.f32.mrb[0].mxu0
        %662 = vmatprep.mubr.bf16.mxu0 0
        %663 = vmatmul.mubr.bf16.gmra.mrb[0].mxu0 %v518
        %v664 = vpop.f32.mrb[0].mxu0
        %v665 = vadd.f32 %v541, %v664
        %v666 = vpop.f32.mrb[0].mxu0
        %v667 = vpop.f32.mrb[0].mxu0
        %v668 = vadd.f32 %v541, %v667
        %v669 = vpop.f32.mrb[0].mxu0
        %670 = vmatprep.mubr.bf16.mxu0 0
        %671 = vmatmul.mubr.bf16.gmra.mrb[0].mxu0 %v519
        %v672 = vpop.f32.mrb[0].mxu0
        %v673 = vadd.f32 %v541, %v672
        %v674 = vpop.f32.mrb[0].mxu0
        %v675 = vpop.f32.mrb[0].mxu0
        %v676 = vadd.f32 %v541, %v675
        %v677 = vpop.f32.mrb[0].mxu0
        %678 = vmatprep.mubr.bf16.mxu0 0
        %679 = vmatmul.mubr.bf16.gmra.mrb[0].mxu0 %v520
        %v680 = vpop.f32.mrb[0].mxu0
        %v681 = vadd.f32 %v541, %v680
        %v682 = vpop.f32.mrb[0].mxu0
        %v683 = vpop.f32.mrb[0].mxu0
        %v684 = vadd.f32 %v541, %v683
        %v685 = vpop.f32.mrb[0].mxu0
        %686 = vdwg.mxu0
        %v687 = vmax.f32 %v625, 0.0
        %v688 = vmax.f32 %v628, 0.0
        %v689 = vmax.f32 %v633, 0.0
        %v690 = vmax.f32 %v636, 0.0
        %v691 = vmax.f32 %v641, 0.0
        %v692 = vmax.f32 %v644, 0.0
        %v693 = vmax.f32 %v649, 0.0
        %v694 = vmax.f32 %v652, 0.0
        %v695 = vmax.f32 %v657, 0.0
        %v696 = vmax.f32 %v660, 0.0
        %v697 = vmax.f32 %v665, 0.0
        %v698 = vmax.f32 %v668, 0.0
        %v699 = vmax.f32 %v673, 0.0
        %v700 = vmax.f32 %v676, 0.0
        %v701 = vmax.f32 %v681, 0.0
        %v702 = vmax.f32 %v684, 0.0
        %v703 = vpack.c.bf16 %v688, %v687
        %v704 = vpack.c.bf16 %v690, %v689
        %v705 = vpack.c.bf16 %v692, %v691
        %v706 = vpack.c.bf16 %v694, %v693
        %v707 = vpack.c.bf16 %v696, %v695
        %v708 = vpack.c.bf16 %v698, %v697
        %v709 = vpack.c.bf16 %v700, %v699
        %v710 = vpack.c.bf16 %v702, %v701
        %v711 = vld [vmem:[%s3] sm:$0xf]
        %v712 = vld [vmem:[%s3 + $0x4] sm:$0xf]
        %v713 = vld [vmem:[%s3 + $0x8] sm:$0xf]
        %v714 = vld [vmem:[%s3 + $0xc] sm:$0xf]
        %v715 = vld [vmem:[%s3 + $0x10] sm:$0xf]
        %v716 = vld [vmem:[%s3 + $0x14] sm:$0xf]
        %v717 = vld [vmem:[%s3 + $0x18] sm:$0xf]
        %v718 = vld [vmem:[%s3 + $0x1c] sm:$0xf]
        %v719 = vld [vmem:[%s3 + $0x20] sm:$0xf]
        %v720 = vld [vmem:[%s3 + $0x24] sm:$0xf]
        %v721 = vld [vmem:[%s3 + $0x28] sm:$0xf]
        %v722 = vld [vmem:[%s3 + $0x2c] sm:$0xf]
        %v723 = vld [vmem:[%s3 + $0x30] sm:$0xf]
        %v724 = vld [vmem:[%s3 + $0x34] sm:$0xf]
        %v725 = vld [vmem:[%s3 + $0x38] sm:$0xf]
        %v726 = vld [vmem:[%s3 + $0x3c] sm:$0xf]
        %v727 = vld [vmem:[%s5 + $0x2] sm:$0x1]
        %v728 = vlaneseq
        %v729 = vshrl.u32 %v728, 7
        %v730 = vsub.s32 0, %v729
        %v731 = vrot.slane %v727, %v730
        %v748 = vunpack.c.l.b16 %v711
        %v749 = vunpack.c.l.b16 %v712
        %v750 = vunpack.c.l.b16 %v713
        %v751 = vunpack.c.l.b16 %v714
        %v752 = vunpack.c.l.b16 %v715
        %v753 = vunpack.c.l.b16 %v716
        %v754 = vunpack.c.l.b16 %v717
        %v755 = vunpack.c.l.b16 %v718
        %v756 = vunpack.c.l.b16 %v719
        %v757 = vunpack.c.l.b16 %v720
        %v758 = vunpack.c.l.b16 %v721
        %v759 = vunpack.c.l.b16 %v722
        %v760 = vunpack.c.l.b16 %v723
        %v761 = vunpack.c.l.b16 %v724
        %v762 = vunpack.c.l.b16 %v725
        %v763 = vunpack.c.l.b16 %v726
        %v764 = vpack.c.b16 %v749, %v748
        %v765 = vpack.c.b16 %v751, %v750
        %v766 = vpack.c.b16 %v753, %v752
        %v767 = vpack.c.b16 %v755, %v754
        %v768 = vpack.c.b16 %v757, %v756
        %v769 = vpack.c.b16 %v759, %v758
        %v770 = vpack.c.b16 %v761, %v760
        %v771 = vpack.c.b16 %v763, %v762
        %780 = vmatprep.subr.bf16.mxu0 0
        %781 = vmatpush1.bf16.msra.mxu0 %v764
        %782 = vmatprep.subr.bf16.mxu0 0
        %783 = vmatpush1.bf16.msra.mxu0 %v765
        %784 = vmatprep.subr.bf16.mxu0 0
        %785 = vmatpush1.bf16.msra.mxu0 %v766
        %786 = vmatprep.subr.bf16.mxu0 0
        %787 = vmatpush1.bf16.msra.mxu0 %v767
        %788 = vmatprep.subr.bf16.mxu0 0
        %789 = vmatpush1.bf16.msra.mxu0 %v768
        %790 = vmatprep.subr.bf16.mxu0 0
        %791 = vmatpush1.bf16.msra.mxu0 %v769
        %792 = vmatprep.subr.bf16.mxu0 0
        %793 = vmatpush1.bf16.msra.mxu0 %v770
        %794 = vmatprep.subr.bf16.mxu0 0
        %795 = vmatpush1.bf16.msra.mxu0 %v771
        %796 = vmatprep.subr.bf16.mxu0 0
        %797 = vmatpush1.bf16.msra.mxu0 0
        %798 = vmatprep.subr.bf16.mxu0 0
        %799 = vmatpush1.bf16.msra.mxu0 0
        %800 = vmatprep.subr.bf16.mxu0 0
        %801 = vmatpush1.bf16.msra.mxu0 0
        %802 = vmatprep.subr.bf16.mxu0 0
        %803 = vmatpush1.bf16.msra.mxu0 0
        %804 = vmatprep.subr.bf16.mxu0 0
        %805 = vmatpush1.bf16.msra.mxu0 0
        %806 = vmatprep.subr.bf16.mxu0 0
        %807 = vmatpush1.bf16.msra.mxu0 0
        %808 = vmatprep.subr.bf16.mxu0 0
        %809 = vmatpush1.bf16.msra.mxu0 0
        %810 = vmatprep.subr.bf16.mxu0 0
        %811 = vmatpush1.bf16.msra.mxu0 0
        %812 = vmatprep.mubr.bf16.mxu0 0
        %813 = vmatmul.mubr.bf16.gmra.mrb[0].mxu0 %v703
        %v814 = vpop.f32.mrb[0].mxu0
        %v815 = vadd.f32 %v731, %v814
        %v816 = vpop.f32.mrb[0].mxu0
        %v817 = vpop.f32.mrb[0].mxu0
        %v818 = vadd.f32 %v731, %v817
        %v819 = vpop.f32.mrb[0].mxu0
        %820 = vmatprep.mubr.bf16.mxu0 0
        %821 = vmatmul.mubr.bf16.gmra.mrb[0].mxu0 %v704
        %v822 = vpop.f32.mrb[0].mxu0
        %v823 = vadd.f32 %v731, %v822
        %v824 = vpop.f32.mrb[0].mxu0
        %v825 = vpop.f32.mrb[0].mxu0
        %v826 = vadd.f32 %v731, %v825
        %v827 = vpop.f32.mrb[0].mxu0
        %828 = vmatprep.mubr.bf16.mxu0 0
        %829 = vmatmul.mubr.bf16.gmra.mrb[0].mxu0 %v705
        %v830 = vpop.f32.mrb[0].mxu0
        %v831 = vadd.f32 %v731, %v830
        %v832 = vpop.f32.mrb[0].mxu0
        %v833 = vpop.f32.mrb[0].mxu0
        %v834 = vadd.f32 %v731, %v833
        %v835 = vpop.f32.mrb[0].mxu0
        %836 = vmatprep.mubr.bf16.mxu0 0
        %837 = vmatmul.mubr.bf16.gmra.mrb[0].mxu0 %v706
        %v838 = vpop.f32.mrb[0].mxu0
        %v839 = vadd.f32 %v731, %v838
        %v840 = vpop.f32.mrb[0].mxu0
        %v841 = vpop.f32.mrb[0].mxu0
        %v842 = vadd.f32 %v731, %v841
        %v843 = vpop.f32.mrb[0].mxu0
        %844 = vmatprep.mubr.bf16.mxu0 0
        %845 = vmatmul.mubr.bf16.gmra.mrb[0].mxu0 %v707
        %v846 = vpop.f32.mrb[0].mxu0
        %v847 = vadd.f32 %v731, %v846
        %v848 = vpop.f32.mrb[0].mxu0
        %v849 = vpop.f32.mrb[0].mxu0
        %v850 = vadd.f32 %v731, %v849
        %v851 = vpop.f32.mrb[0].mxu0
        %852 = vmatprep.mubr.bf16.mxu0 0
        %853 = vmatmul.mubr.bf16.gmra.mrb[0].mxu0 %v708
        %v854 = vpop.f32.mrb[0].mxu0
        %v855 = vadd.f32 %v731, %v854
        %v856 = vpop.f32.mrb[0].mxu0
        %v857 = vpop.f32.mrb[0].mxu0
        %v858 = vadd.f32 %v731, %v857
        %v859 = vpop.f32.mrb[0].mxu0
        %860 = vmatprep.mubr.bf16.mxu0 0
        %861 = vmatmul.mubr.bf16.gmra.mrb[0].mxu0 %v709
        %v862 = vpop.f32.mrb[0].mxu0
        %v863 = vadd.f32 %v731, %v862
        %v864 = vpop.f32.mrb[0].mxu0
        %v865 = vpop.f32.mrb[0].mxu0
        %v866 = vadd.f32 %v731, %v865
        %v867 = vpop.f32.mrb[0].mxu0
        %868 = vmatprep.mubr.bf16.mxu0 0
        %869 = vmatmul.mubr.bf16.gmra.mrb[0].mxu0 %v710
        %v870 = vpop.f32.mrb[0].mxu0
        %v871 = vadd.f32 %v731, %v870
        %v872 = vpop.f32.mrb[0].mxu0
        %v873 = vpop.f32.mrb[0].mxu0
        %v874 = vadd.f32 %v731, %v873
        %v875 = vpop.f32.mrb[0].mxu0
        %876 = vdwg.mxu0
        %v877 = vmax.f32 %v815, 0.0
        %v878 = vmax.f32 %v818, 0.0
        %v879 = vmax.f32 %v823, 0.0
        %v880 = vmax.f32 %v826, 0.0
        %v881 = vmax.f32 %v831, 0.0
        %v882 = vmax.f32 %v834, 0.0
        %v883 = vmax.f32 %v839, 0.0
        %v884 = vmax.f32 %v842, 0.0
        %v885 = vmax.f32 %v847, 0.0
        %v886 = vmax.f32 %v850, 0.0
        %v887 = vmax.f32 %v855, 0.0
        %v888 = vmax.f32 %v858, 0.0
        %v889 = vmax.f32 %v863, 0.0
        %v890 = vmax.f32 %v866, 0.0
        %v891 = vmax.f32 %v871, 0.0
        %v892 = vmax.f32 %v874, 0.0
        %v893 = vpack.c.bf16 %v878, %v877
        %v894 = vpack.c.bf16 %v880, %v879
        %v895 = vpack.c.bf16 %v882, %v881
        %v896 = vpack.c.bf16 %v884, %v883
        %v897 = vpack.c.bf16 %v886, %v885
        %v898 = vpack.c.bf16 %v888, %v887
        %v899 = vpack.c.bf16 %v890, %v889
        %v900 = vpack.c.bf16 %v892, %v891
        %v901 = vld [vmem:[%s4] sm:$0xf]
        %v902 = vld [vmem:[%s4 + $0x4] sm:$0xf]
        %v903 = vld [vmem:[%s4 + $0x8] sm:$0xf]
        %v904 = vld [vmem:[%s4 + $0xc] sm:$0xf]
        %v905 = vld [vmem:[%s4 + $0x10] sm:$0xf]
        %v906 = vld [vmem:[%s4 + $0x14] sm:$0xf]
        %v907 = vld [vmem:[%s4 + $0x18] sm:$0xf]
        %v908 = vld [vmem:[%s4 + $0x1c] sm:$0xf]
        %v909 = vld [vmem:[%s4 + $0x20] sm:$0xf]
        %v910 = vld [vmem:[%s4 + $0x24] sm:$0xf]
        %v911 = vld [vmem:[%s4 + $0x28] sm:$0xf]
        %v912 = vld [vmem:[%s4 + $0x2c] sm:$0xf]
        %v913 = vld [vmem:[%s4 + $0x30] sm:$0xf]
        %v914 = vld [vmem:[%s4 + $0x34] sm:$0xf]
        %v915 = vld [vmem:[%s4 + $0x38] sm:$0xf]
        %v916 = vld [vmem:[%s4 + $0x3c] sm:$0xf]
        %v933 = vunpack.c.l.b16 %v901
        %v934 = vunpack.c.l.b16 %v902
        %v935 = vunpack.c.l.b16 %v903
        %v936 = vunpack.c.l.b16 %v904
        %v937 = vunpack.c.l.b16 %v905
        %v938 = vunpack.c.l.b16 %v906
        %v939 = vunpack.c.l.b16 %v907
        %v940 = vunpack.c.l.b16 %v908
        %v941 = vunpack.c.l.b16 %v909
        %v942 = vunpack.c.l.b16 %v910
        %v943 = vunpack.c.l.b16 %v911
        %v944 = vunpack.c.l.b16 %v912
        %v945 = vunpack.c.l.b16 %v913
        %v946 = vunpack.c.l.b16 %v914
        %v947 = vunpack.c.l.b16 %v915
        %v948 = vunpack.c.l.b16 %v916
        %v949 = vpack.c.b16 %v934, %v933
        %v950 = vpack.c.b16 %v936, %v935
        %v951 = vpack.c.b16 %v938, %v937
        %v952 = vpack.c.b16 %v940, %v939
        %v953 = vpack.c.b16 %v942, %v941
        %v954 = vpack.c.b16 %v944, %v943
        %v955 = vpack.c.b16 %v946, %v945
        %v956 = vpack.c.b16 %v948, %v947
        %965 = vmatprep.subr.bf16.mxu0 0
        %966 = vmatpush1.bf16.msra.mxu0 %v949
        %967 = vmatprep.subr.bf16.mxu0 0
        %968 = vmatpush1.bf16.msra.mxu0 %v950
        %969 = vmatprep.subr.bf16.mxu0 0
        %970 = vmatpush1.bf16.msra.mxu0 %v951
        %971 = vmatprep.subr.bf16.mxu0 0
        %972 = vmatpush1.bf16.msra.mxu0 %v952
        %973 = vmatprep.subr.bf16.mxu0 0
        %974 = vmatpush1.bf16.msra.mxu0 %v953
        %975 = vmatprep.subr.bf16.mxu0 0
        %976 = vmatpush1.bf16.msra.mxu0 %v954
        %977 = vmatprep.subr.bf16.mxu0 0
        %978 = vmatpush1.bf16.msra.mxu0 %v955
        %979 = vmatprep.subr.bf16.mxu0 0
        %980 = vmatpush1.bf16.msra.mxu0 %v956
        %981 = vmatprep.subr.bf16.mxu0 0
        %982 = vmatpush1.bf16.msra.mxu0 0
        %983 = vmatprep.subr.bf16.mxu0 0
        %984 = vmatpush1.bf16.msra.mxu0 0
        %985 = vmatprep.subr.bf16.mxu0 0
        %986 = vmatpush1.bf16.msra.mxu0 0
        %987 = vmatprep.subr.bf16.mxu0 0
        %988 = vmatpush1.bf16.msra.mxu0 0
        %989 = vmatprep.subr.bf16.mxu0 0
        %990 = vmatpush1.bf16.msra.mxu0 0
        %991 = vmatprep.subr.bf16.mxu0 0
        %992 = vmatpush1.bf16.msra.mxu0 0
        %993 = vmatprep.subr.bf16.mxu0 0
        %994 = vmatpush1.bf16.msra.mxu0 0
        %995 = vmatprep.subr.bf16.mxu0 0
        %996 = vmatpush1.bf16.msra.mxu0 0
        %997 = vmatprep.mubr.bf16.mxu0 0
        %998 = vmatmul.mubr.bf16.gmra.mrb[0].mxu0 %v893
        %v999 = vpop.f32.mrb[0].mxu0
        %v1000 = vadd.f32 0.0, %v999
        %v1001 = vpop.f32.mrb[0].mxu0
        %v1002 = vpop.f32.mrb[0].mxu0
        %v1003 = vadd.f32 0.0, %v1002
        %v1004 = vpop.f32.mrb[0].mxu0
        %1005 = vmatprep.mubr.bf16.mxu0 0
        %1006 = vmatmul.mubr.bf16.gmra.mrb[0].mxu0 %v894
        %v1007 = vpop.f32.mrb[0].mxu0
        %v1008 = vadd.f32 0.0, %v1007
        %v1009 = vpop.f32.mrb[0].mxu0
        %v1010 = vpop.f32.mrb[0].mxu0
        %v1011 = vadd.f32 0.0, %v1010
        %v1012 = vpop.f32.mrb[0].mxu0
        %1013 = vmatprep.mubr.bf16.mxu0 0
        %1014 = vmatmul.mubr.bf16.gmra.mrb[0].mxu0 %v895
        %v1015 = vpop.f32.mrb[0].mxu0
        %v1016 = vadd.f32 0.0, %v1015
        %v1017 = vpop.f32.mrb[0].mxu0
        %v1018 = vpop.f32.mrb[0].mxu0
        %v1019 = vadd.f32 0.0, %v1018
        %v1020 = vpop.f32.mrb[0].mxu0
        %1021 = vmatprep.mubr.bf16.mxu0 0
        %1022 = vmatmul.mubr.bf16.gmra.mrb[0].mxu0 %v896
        %v1023 = vpop.f32.mrb[0].mxu0
        %v1024 = vadd.f32 0.0, %v1023
        %v1025 = vpop.f32.mrb[0].mxu0
        %v1026 = vpop.f32.mrb[0].mxu0
        %v1027 = vadd.f32 0.0, %v1026
        %v1028 = vpop.f32.mrb[0].mxu0
        %1029 = vmatprep.mubr.bf16.mxu0 0
        %1030 = vmatmul.mubr.bf16.gmra.mrb[0].mxu0 %v897
        %v1031 = vpop.f32.mrb[0].mxu0
        %v1032 = vadd.f32 0.0, %v1031
        %v1033 = vpop.f32.mrb[0].mxu0
        %v1034 = vpop.f32.mrb[0].mxu0
        %v1035 = vadd.f32 0.0, %v1034
        %v1036 = vpop.f32.mrb[0].mxu0
        %1037 = vmatprep.mubr.bf16.mxu0 0
        %1038 = vmatmul.mubr.bf16.gmra.mrb[0].mxu0 %v898
        %v1039 = vpop.f32.mrb[0].mxu0
        %v1040 = vadd.f32 0.0, %v1039
        %v1041 = vpop.f32.mrb[0].mxu0
        %v1042 = vpop.f32.mrb[0].mxu0
        %v1043 = vadd.f32 0.0, %v1042
        %v1044 = vpop.f32.mrb[0].mxu0
        %1045 = vmatprep.mubr.bf16.mxu0 0
        %1046 = vmatmul.mubr.bf16.gmra.mrb[0].mxu0 %v899
        %v1047 = vpop.f32.mrb[0].mxu0
        %v1048 = vadd.f32 0.0, %v1047
        %v1049 = vpop.f32.mrb[0].mxu0
        %v1050 = vpop.f32.mrb[0].mxu0
        %v1051 = vadd.f32 0.0, %v1050
        %v1052 = vpop.f32.mrb[0].mxu0
        %1053 = vmatprep.mubr.bf16.mxu0 0
        %1054 = vmatmul.mubr.bf16.gmra.mrb[0].mxu0 %v900
        %v1055 = vpop.f32.mrb[0].mxu0
        %v1056 = vadd.f32 0.0, %v1055
        %v1057 = vpop.f32.mrb[0].mxu0
        %v1058 = vpop.f32.mrb[0].mxu0
        %v1059 = vadd.f32 0.0, %v1058
        %v1060 = vpop.f32.mrb[0].mxu0
        %1061 = vdwg.mxu0
        %1062 = vxpose.xlu0.b32.start [1/16] %v1000, 128
        %1063 = vxpose.xlu0.b32.cont [2/16] %v1003, 128
        %1064 = vxpose.xlu0.b32.cont [3/16] %v1008, 128
        %1065 = vxpose.xlu0.b32.cont [4/16] %v1011, 128
        %1066 = vxpose.xlu0.b32.cont [5/16] %v1016, 128
        %1067 = vxpose.xlu0.b32.cont [6/16] %v1019, 128
        %1068 = vxpose.xlu0.b32.cont [7/16] %v1024, 128
        %1069 = vxpose.xlu0.b32.cont [8/16] %v1027, 128
        %1070 = vxpose.xlu0.b32.cont [9/16] %v1032, 128
        %1071 = vxpose.xlu0.b32.cont [10/16] %v1035, 128
        %1072 = vxpose.xlu0.b32.cont [11/16] %v1040, 128
        %1073 = vxpose.xlu0.b32.cont [12/16] %v1043, 128
        %1074 = vxpose.xlu0.b32.cont [13/16] %v1048, 128
        %1075 = vxpose.xlu0.b32.cont [14/16] %v1051, 128
        %1076 = vxpose.xlu0.b32.cont [15/16] %v1056, 128
        %1077 = vxpose.xlu0.b32.end [16/16] %v1059, 128
        %v1078 = vpop.trf.xlu0
        %v1079 = vpop.trf.xlu0
        %v1080 = vpop.trf.xlu0
        %v1081 = vpop.trf.xlu0
        %v1082 = vpop.trf.xlu0
        %v1083 = vpop.trf.xlu0
        %v1084 = vpop.trf.xlu0
        %v1085 = vpop.trf.xlu0
        %v1086 = vpop.trf.xlu0
        %v1087 = vpop.trf.xlu0
        %v1088 = vpop.trf.xlu0
        %v1089 = vpop.trf.xlu0
        %v1090 = vpop.trf.xlu0
        %v1091 = vpop.trf.xlu0
        %v1092 = vpop.trf.xlu0
        %v1093 = vpop.trf.xlu0
        %s1094 = sld [smem:[#allocation2]]
        %v1095 = vstv %s1094
        %v1096 = vadd.f32 %v1078, %v1095
        %v1097 = vmax.f32 %v1096, 0.0
        %1098 = vst [vmem:[%s272] sm:$0x1] %v1097
        %s1099 = sand.u32 %s182, 1
        %s1100 = scalar_lea.sflag [#allocation4], %s1099
        %s1101 = sand.u32 %s182, 1
        %s1102 = scalar_lea.vmem [#allocation3], %s1101
        // Predicated region
        $region49: #{tpu_custom_call.1} parent=47 // pred_check
          %p1103 = pneg %p192
        $region50: #{tpu_custom_call.1} parent=47 // pred_check_branch
          %1105 = sbr.rel (%p1103) target = $region52
        $region51: #{tpu_custom_call.1} parent=47 // pred_region
          %s1107 = ssub.s32 16, 16
          %1108 = vsyncadd %s1100, %s1107
          %s1109 = smul.addr %s22, 16
          %s1110 = scalar_lea.hbm %s7, %s1109
          %s1112 = sshll.u32 %s1102, 4
          %s1113 = int_to_ptr.vmem [resolvable:$true] %s1112
          %1115 = dma.vmem_to_hbm [thread:$0]  %s1113, 16, %s1110, %s1100
        $region52: #{tpu_custom_call.1} parent=47 // pred_fallthru
          _
      $region48: #{tpu_custom_call.1} parent=5 // pred_fallthru
        _
      %p1116 = scmp.le.s32.totalorder 2, %s17
      // Predicated region
      $region53: #{tpu_custom_call.1} parent=5 // pred_check
        %p1117 = pneg %p1116
      $region54: #{tpu_custom_call.1} parent=5 // pred_check_branch
        %1119 = sbr.rel (%p1117) target = $region56
      $region55: #{tpu_custom_call.1} parent=5 // pred_region
        %s1120 = ssub.s32 %s17, 2
        // Predicated region
        $region57: #{tpu_custom_call.1} parent=55 // pred_check
          %p1121 = pneg %p198
        $region58: #{tpu_custom_call.1} parent=55 // pred_check_branch
          %1123 = sbr.rel (%p1121) target = $region60
        $region59: #{tpu_custom_call.1} parent=55 // pred_region
          %s1124 = sand.u32 %s183, 1
          %s1125 = scalar_lea.sflag [#allocation4], %s1124
          %s1126 = sand.u32 %s183, 1
          %s1127 = scalar_lea.vmem [#allocation3], %s1126
          %1128 = dma.done %s1125, 16
        $region60: #{tpu_custom_call.1} parent=55 // pred_fallthru
          _
      $region56: #{tpu_custom_call.1} parent=5 // pred_fallthru
        _
    $region6: #{tpu_custom_call.1} parent=1 // loop_footer
      %s21 = sadd.s32 1, %s17
    $region7: #{tpu_custom_call.1} parent=1 // loop_footer_branch
      %16 = sbr.rel target = $region3
    $region8: #{tpu_custom_call.1} parent=1 // loop_exit
      _
    %1129 = vsyncpa [#allocation4], 1
    %s1130 = scalar_lea.sflag [#allocation4], 1
    %1131 = vsyncpa %s1130, 1

</llo_original>
